<compile_context>
chip_gen: v5e
topology: v5e:2x2
jax: 0.10.0
libtpu: 0.0.40
codegen_flags: <defaults>
</compile_context>

<pallas_src>
import jax
import jax.numpy as jnp
from jax.experimental import pallas as pl
from jax.experimental.pallas import tpu as pltpu


# ----------------------------------------------------------------------------
# Pallas kernel: separable 3x3 binomial blur with reflect boundary on a
# (bc, H, W) tile. H maps to sublanes, W to lanes (dense stores).
# ----------------------------------------------------------------------------
def _blur3x3_kernel(x_ref, y_ref):
    x = x_ref[...].astype(jnp.float32)                               # (bc, H, W)

    # Vertical pass: v[i] = 0.25*x[reflect(i-1)] + 0.5*x[i] + 0.25*x[reflect(i+1)]
    up = jnp.concatenate([x[:, 1:2, :], x[:, :-1, :]], axis=1)       # x[reflect(i-1)]
    down = jnp.concatenate([x[:, 1:, :], x[:, -2:-1, :]], axis=1)    # x[reflect(i+1)]
    v = 0.5 * x + 0.25 * (up + down)

    # Horizontal pass: same [1,2,1]/4 filter along W with reflect boundary.
    left = jnp.concatenate([v[:, :, 1:2], v[:, :, :-1]], axis=2)     # v[reflect(j-1)]
    right = jnp.concatenate([v[:, :, 1:], v[:, :, -2:-1]], axis=2)   # v[reflect(j+1)]
    y_ref[...] = (0.5 * v + 0.25 * (left + right)).astype(y_ref.dtype)


# ----------------------------------------------------------------------------
# Wrapper
# ----------------------------------------------------------------------------
def _pick_block_images(nc, img_bytes, target_bytes=2 * 1024 * 1024):
    """Largest divisor of nc whose block stays under ~target_bytes."""
    max_bc = max(1, target_bytes // max(1, img_bytes))
    bc = 1
    for d in range(1, nc + 1):
        if nc % d == 0 and d <= max_bc:
            bc = d
    return bc


@jax.jit
def blur2d(x):
    """Depthwise 3x3 blur with reflect padding. x: (N, C, H, W)."""
    n, c, h, w = x.shape
    assert h >= 2 and w >= 2, "reflect pad of 1 requires H >= 2 and W >= 2"
    nc = n * c
    x3 = x.reshape(nc, h, w)                       # free reshape, channel-first kept

    itemsize = jnp.dtype(x.dtype).itemsize
    img_bytes = h * w * itemsize
    bc = _pick_block_images(nc, img_bytes)
    block_bytes = bc * img_bytes

    cp_kwargs = dict(dimension_semantics=("parallel",))
    # in + out, each double-buffered, plus slack; raise scoped VMEM only if needed.
    need = 4 * block_bytes + (2 << 20)
    if need > (24 << 20):
        cp_kwargs["vmem_limit_bytes"] = int(need)

    y3 = pl.pallas_call(
        _blur3x3_kernel,
        out_shape=jax.ShapeDtypeStruct((nc, h, w), x.dtype),
        grid_spec=pltpu.PrefetchScalarGridSpec(
            num_scalar_prefetch=0,
            grid=(nc // bc,),
            in_specs=[pl.BlockSpec((bc, h, w), lambda i: (i, 0, 0))],
            out_specs=pl.BlockSpec((bc, h, w), lambda i: (i, 0, 0)),
        ),
        compiler_params=pltpu.CompilerParams(**cp_kwargs),
    )(x3)
    return y3.reshape(n, c, h, w)


# ----------------------------------------------------------------------------
# Pure-JAX reference (matches F.pad(reflect) + depthwise conv2d)
# ----------------------------------------------------------------------------
def blur2d_reference(x):
    w3 = jnp.array([[1.0, 2.0, 1.0],
                    [2.0, 4.0, 2.0],
                    [1.0, 2.0, 1.0]], dtype=jnp.float32) / 16.0
    xp = jnp.pad(x, ((0, 0), (0, 0), (1, 1), (1, 1)), mode="reflect")
    H, W = x.shape[2], x.shape[3]
    out = jnp.zeros_like(x)
    for di in range(3):
        for dj in range(3):
            out = out + w3[di, dj] * xp[:, :, di:di + H, dj:dj + W]
    return out


# ----------------------------------------------------------------------------
if __name__ == "__main__":
    # Small, lane-dense test shape: batch=2, channels=4 (in_plane=4), H=32, W=128.
    N, C, H, W = 2, 4, 32, 128
    key = jax.random.PRNGKey(0)
    x = jax.random.normal(key, (N, C, H, W), dtype=jnp.float32)

    y = jax.block_until_ready(blur2d(x))
    y_ref = jax.block_until_ready(blur2d_reference(x))

    assert y.shape == x.shape and y.dtype == x.dtype
    max_err = float(jnp.max(jnp.abs(y - y_ref)))
    assert max_err < 1e-5, f"mismatch vs reference: {max_err}"

    print("KERNEL_OK")
</pallas_src>

<mosaic_0001>
module attributes {stable_mosaic.version = 11 : i64} {
  func.func @_blur3x3_kernel(%arg0: i32, %arg1: memref<8x32x128xf32, #tpu.memory_space<vmem>>, %arg2: memref<8x32x128xf32, #tpu.memory_space<vmem>>) attributes {dimension_semantics = [#tpu.dimension_semantics<parallel>], iteration_bounds = array<i64: 1>, scalar_prefetch = 0 : i64, scratch_operands = 0 : i64, tpu.core_type = #tpu.core_type<tc>, window_params = [{transform_indices = @transform_0, window_bounds = array<i64: 8, 32, 128>}, {transform_indices = @transform_1, window_bounds = array<i64: 8, 32, 128>}]} {
    %c0 = arith.constant 0 : index
    %c0_0 = arith.constant 0 : index
    %c0_1 = arith.constant 0 : index
    %0 = vector.load %arg1[%c0, %c0_0, %c0_1] : memref<8x32x128xf32, #tpu.memory_space<vmem>>, vector<8x32x128xf32>
    %1 = vector.extract_strided_slice %0 {offsets = [0, 1, 0], sizes = [8, 1, 128], strides = [1, 1, 1]} : vector<8x32x128xf32> to vector<8x1x128xf32>
    %2 = vector.extract_strided_slice %0 {offsets = [0, 0, 0], sizes = [8, 31, 128], strides = [1, 1, 1]} : vector<8x32x128xf32> to vector<8x31x128xf32>
    %3 = tpu.concatenate %1, %2 in 1 : vector<8x1x128xf32>, vector<8x31x128xf32> -> vector<8x32x128xf32>
    %4 = vector.extract_strided_slice %0 {offsets = [0, 1, 0], sizes = [8, 31, 128], strides = [1, 1, 1]} : vector<8x32x128xf32> to vector<8x31x128xf32>
    %5 = vector.extract_strided_slice %0 {offsets = [0, 30, 0], sizes = [8, 1, 128], strides = [1, 1, 1]} : vector<8x32x128xf32> to vector<8x1x128xf32>
    %6 = tpu.concatenate %4, %5 in 1 : vector<8x31x128xf32>, vector<8x1x128xf32> -> vector<8x32x128xf32>
    %cst = arith.constant 5.000000e-01 : f32
    %7 = vector.broadcast %cst : f32 to vector<8x32x128xf32>
    %8 = arith.mulf %7, %0 : vector<8x32x128xf32>
    %9 = arith.addf %3, %6 : vector<8x32x128xf32>
    %cst_2 = arith.constant 2.500000e-01 : f32
    %10 = vector.broadcast %cst_2 : f32 to vector<8x32x128xf32>
    %11 = arith.mulf %10, %9 : vector<8x32x128xf32>
    %12 = arith.addf %8, %11 : vector<8x32x128xf32>
    %13 = vector.extract_strided_slice %12 {offsets = [0, 0, 1], sizes = [8, 32, 1], strides = [1, 1, 1]} : vector<8x32x128xf32> to vector<8x32x1xf32>
    %14 = vector.extract_strided_slice %12 {offsets = [0, 0, 0], sizes = [8, 32, 127], strides = [1, 1, 1]} : vector<8x32x128xf32> to vector<8x32x127xf32>
    %15 = tpu.concatenate %13, %14 in 2 : vector<8x32x1xf32>, vector<8x32x127xf32> -> vector<8x32x128xf32>
    %16 = vector.extract_strided_slice %12 {offsets = [0, 0, 1], sizes = [8, 32, 127], strides = [1, 1, 1]} : vector<8x32x128xf32> to vector<8x32x127xf32>
    %17 = vector.extract_strided_slice %12 {offsets = [0, 0, 126], sizes = [8, 32, 1], strides = [1, 1, 1]} : vector<8x32x128xf32> to vector<8x32x1xf32>
    %18 = tpu.concatenate %16, %17 in 2 : vector<8x32x127xf32>, vector<8x32x1xf32> -> vector<8x32x128xf32>
    %cst_3 = arith.constant 5.000000e-01 : f32
    %19 = vector.broadcast %cst_3 : f32 to vector<8x32x128xf32>
    %20 = arith.mulf %19, %12 : vector<8x32x128xf32>
    %21 = arith.addf %15, %18 : vector<8x32x128xf32>
    %cst_4 = arith.constant 2.500000e-01 : f32
    %22 = vector.broadcast %cst_4 : f32 to vector<8x32x128xf32>
    %23 = arith.mulf %22, %21 : vector<8x32x128xf32>
    %24 = arith.addf %20, %23 : vector<8x32x128xf32>
    %c0_5 = arith.constant 0 : index
    %c0_6 = arith.constant 0 : index
    %c0_7 = arith.constant 0 : index
    %25 = vector.load %arg2[%c0_5, %c0_6, %c0_7] : memref<8x32x128xf32, #tpu.memory_space<vmem>>, vector<8x32x128xf32>
    tpu.vector_store %arg2[%c0_5, %c0_6, %c0_7], %24 {strides = array<i32>} : memref<8x32x128xf32, #tpu.memory_space<vmem>>, vector<8x32x128xf32>,
    return
  }
  func.func @transform_0(%arg0: i32) -> (i32, i32, i32) {
    %c0_i32 = arith.constant 0 : i32
    %c0_i32_0 = arith.constant 0 : i32
    %c0_i32_1 = arith.constant 0 : i32
    return %arg0, %c0_i32, %c0_i32_0 : i32, i32, i32
  }
  func.func @transform_1(%arg0: i32) -> (i32, i32, i32) {
    %c0_i32 = arith.constant 0 : i32
    %c0_i32_0 = arith.constant 0 : i32
    %c0_i32_1 = arith.constant 0 : i32
    return %arg0, %c0_i32, %c0_i32_0 : i32, i32, i32
  }
}

</mosaic_0001>

<llo_original>
// kernel: blur2d.1
$region0: #{blur2d.1}
  #allocation0 [shape = 'u32[]', space=smem, size = 0x4, offset = 0x4, fixed_abs, tag = 'smem constant byte address 0x4 - core index']
  #allocation1 [shape = 'u32[72,128]{1,0:T(1,128)}', space=vmem, size = 0x9000, scoped, tag = 'internal scratch']
  %s0 = inlined_call_operand.hbm [shape: f32[8,32,128], index: 0, kind: input, shape index: {}]
  %s1 = inlined_call_operand.hbm [shape: f32[8,32,128], index: 1, kind: output, shape index: {}]
  %s2 = sld [smem:[#allocation0]]
  $region18: #{blur2d.1} parent=0
    _
  %s4 = ssub.s32 1, %s2
  %s5 = scalar_select 0, %s4, %s2
  $region1: #{blur2d.1} parent=0
    #allocation2 [shape = 'u8[131072]{0}', space=vmem, size = 0x20000, scoped, tag = 'input window, operand 0, single buffered']
    #allocation3 [shape = 's32[1]{0}', space=sflag, size = 0x4, scoped, tag = 'scoped memory for blur2d.1']
    #allocation4 [shape = 's32[1]{0}', space=sflag, size = 0x4, scoped, tag = 'scoped memory for blur2d.1']
    #allocation5 [shape = 'u8[131072]{0}', space=vmem, size = 0x20000, scoped, tag = 'output window, operand 0, single buffered']
    %6 = vsyncpa [#allocation3], 0
    %7 = vsyncpa [#allocation4], 0
    // Predicated region
    $region2: #{blur2d.1} parent=1 // pred_check
      _
    $region3: #{blur2d.1} parent=1 // pred_check_branch
      %9 = sbr.rel (0) target = $region5
    $region4: #{blur2d.1} parent=1 // pred_region
      %11 = vsyncadd [#allocation3], 0
      %s12 = sshll.u32 %s0, 4
      %s13 = int_to_ptr.hbm [resolvable:$true] %s12
      %s14 = sshll.u32 [#allocation2], 4
      %s15 = int_to_ptr.vmem [resolvable:$true] %s14
      %20 = dma.hbm_to_vmem [thread:$0]  %s13, 4096, %s15, [#allocation3], 128, 128, 8
    $region5: #{blur2d.1} parent=1 // pred_fallthru
      _
    // Predicated region
    $region6: #{blur2d.1} parent=1 // pred_check
      _
    $region7: #{blur2d.1} parent=1 // pred_check_branch
      %22 = sbr.rel (0) target = $region9
    $region8: #{blur2d.1} parent=1 // pred_region
      %24 = dma.done [#allocation3], 4096
    $region9: #{blur2d.1} parent=1 // pred_fallthru
      _
    %v25 = vld [vmem:[#allocation2] sm:$0xff]
    %v26 = vld [vmem:[#allocation2 + $0x8] sm:$0xff]
    %v27 = vld [vmem:[#allocation2 + $0x10] sm:$0xff]
    %v28 = vld [vmem:[#allocation2 + $0x18] sm:$0xff]
    %v29 = vld [vmem:[#allocation2 + $0x20] sm:$0xff]
    %v30 = vld [vmem:[#allocation2 + $0x28] sm:$0xff]
    %v31 = vld [vmem:[#allocation2 + $0x30] sm:$0xff]
    %v32 = vld [vmem:[#allocation2 + $0x38] sm:$0xff]
    %v33 = vld [vmem:[#allocation2 + $0x40] sm:$0xff]
    %v34 = vld [vmem:[#allocation2 + $0x48] sm:$0xff]
    %v35 = vld [vmem:[#allocation2 + $0x50] sm:$0xff]
    %v36 = vld [vmem:[#allocation2 + $0x58] sm:$0xff]
    %v37 = vld [vmem:[#allocation2 + $0x60] sm:$0xff]
    %v38 = vld [vmem:[#allocation2 + $0x68] sm:$0xff]
    %v39 = vld [vmem:[#allocation2 + $0x70] sm:$0xff]
    %v40 = vld [vmem:[#allocation2 + $0x78] sm:$0xff]
    %v41 = vld [vmem:[#allocation2 + $0x80] sm:$0xff]
    %v42 = vld [vmem:[#allocation2 + $0x88] sm:$0xff]
    %v43 = vld [vmem:[#allocation2 + $0x90] sm:$0xff]
    %v44 = vld [vmem:[#allocation2 + $0x98] sm:$0xff]
    %v45 = vld [vmem:[#allocation2 + $0xa0] sm:$0xff]
    %v46 = vld [vmem:[#allocation2 + $0xa8] sm:$0xff]
    %v47 = vld [vmem:[#allocation2 + $0xb0] sm:$0xff]
    %v48 = vld [vmem:[#allocation2 + $0xb8] sm:$0xff]
    %v49 = vld [vmem:[#allocation2 + $0xc0] sm:$0xff]
    %v50 = vld [vmem:[#allocation2 + $0xc8] sm:$0xff]
    %v51 = vld [vmem:[#allocation2 + $0xd0] sm:$0xff]
    %v52 = vld [vmem:[#allocation2 + $0xd8] sm:$0xff]
    %v53 = vld [vmem:[#allocation2 + $0xe0] sm:$0xff]
    %v54 = vld [vmem:[#allocation2 + $0xe8] sm:$0xff]
    %v55 = vld [vmem:[#allocation2 + $0xf0] sm:$0xff]
    %v56 = vld [vmem:[#allocation2 + $0xf8] sm:$0xff]
    %v65 = vrot.slane %v25, 1
    %v66 = vrot.slane %v29, 1
    %v67 = vrot.slane %v33, 1
    %v68 = vrot.slane %v37, 1
    %v69 = vrot.slane %v41, 1
    %v70 = vrot.slane %v45, 1
    %v71 = vrot.slane %v49, 1
    %v72 = vrot.slane %v53, 1
    %vm105 = vcmask 1040384
    %v106 = vrot.slane %v25, 7
    %v107 = vrot.slane %v26, 7
    %v108 = vsel %vm105, %v106, %v107
    %v109 = vrot.slane %v27, 7
    %v110 = vsel %vm105, %v107, %v109
    %v111 = vrot.slane %v28, 7
    %v112 = vsel %vm105, %v109, %v111
    %v113 = vrot.slane %v29, 7
    %v114 = vrot.slane %v30, 7
    %v115 = vsel %vm105, %v113, %v114
    %v116 = vrot.slane %v31, 7
    %v117 = vsel %vm105, %v114, %v116
    %v118 = vrot.slane %v32, 7
    %v119 = vsel %vm105, %v116, %v118
    %v120 = vrot.slane %v33, 7
    %v121 = vrot.slane %v34, 7
    %v122 = vsel %vm105, %v120, %v121
    %v123 = vrot.slane %v35, 7
    %v124 = vsel %vm105, %v121, %v123
    %v125 = vrot.slane %v36, 7
    %v126 = vsel %vm105, %v123, %v125
    %v127 = vrot.slane %v37, 7
    %v128 = vrot.slane %v38, 7
    %v129 = vsel %vm105, %v127, %v128
    %v130 = vrot.slane %v39, 7
    %v131 = vsel %vm105, %v128, %v130
    %v132 = vrot.slane %v40, 7
    %v133 = vsel %vm105, %v130, %v132
    %v134 = vrot.slane %v41, 7
    %v135 = vrot.slane %v42, 7
    %v136 = vsel %vm105, %v134, %v135
    %v137 = vrot.slane %v43, 7
    %v138 = vsel %vm105, %v135, %v137
    %v139 = vrot.slane %v44, 7
    %v140 = vsel %vm105, %v137, %v139
    %v141 = vrot.slane %v45, 7
    %v142 = vrot.slane %v46, 7
    %v143 = vsel %vm105, %v141, %v142
    %v144 = vrot.slane %v47, 7
    %v145 = vsel %vm105, %v142, %v144
    %v146 = vrot.slane %v48, 7
    %v147 = vsel %vm105, %v144, %v146
    %v148 = vrot.slane %v49, 7
    %v149 = vrot.slane %v50, 7
    %v150 = vsel %vm105, %v148, %v149
    %v151 = vrot.slane %v51, 7
    %v152 = vsel %vm105, %v149, %v151
    %v153 = vrot.slane %v52, 7
    %v154 = vsel %vm105, %v151, %v153
    %v155 = vrot.slane %v53, 7
    %v156 = vrot.slane %v54, 7
    %v157 = vsel %vm105, %v155, %v156
    %v158 = vrot.slane %v55, 7
    %v159 = vsel %vm105, %v156, %v158
    %v160 = vrot.slane %v56, 7
    %v161 = vsel %vm105, %v158, %v160
    %v194 = vsel %vm105, %v65, %v106
    %v195 = vsel %vm105, %v66, %v113
    %v196 = vsel %vm105, %v67, %v120
    %v197 = vsel %vm105, %v68, %v127
    %v198 = vsel %vm105, %v69, %v134
    %v199 = vsel %vm105, %v70, %v141
    %v200 = vsel %vm105, %v71, %v148
    %v201 = vsel %vm105, %v72, %v155
    %vm202 = vcmask 1046528
    %v203 = vrot.slane %v26, 1
    %v204 = vsel %vm202, %v65, %v203
    %v205 = vrot.slane %v27, 1
    %v206 = vsel %vm202, %v203, %v205
    %v207 = vrot.slane %v28, 1
    %v208 = vsel %vm202, %v205, %v207
    %v209 = vrot.slane %v30, 1
    %v210 = vsel %vm202, %v66, %v209
    %v211 = vrot.slane %v31, 1
    %v212 = vsel %vm202, %v209, %v211
    %v213 = vrot.slane %v32, 1
    %v214 = vsel %vm202, %v211, %v213
    %v215 = vrot.slane %v34, 1
    %v216 = vsel %vm202, %v67, %v215
    %v217 = vrot.slane %v35, 1
    %v218 = vsel %vm202, %v215, %v217
    %v219 = vrot.slane %v36, 1
    %v220 = vsel %vm202, %v217, %v219
    %v221 = vrot.slane %v38, 1
    %v222 = vsel %vm202, %v68, %v221
    %v223 = vrot.slane %v39, 1
    %v224 = vsel %vm202, %v221, %v223
    %v225 = vrot.slane %v40, 1
    %v226 = vsel %vm202, %v223, %v225
    %v227 = vrot.slane %v42, 1
    %v228 = vsel %vm202, %v69, %v227
    %v229 = vrot.slane %v43, 1
    %v230 = vsel %vm202, %v227, %v229
    %v231 = vrot.slane %v44, 1
    %v232 = vsel %vm202, %v229, %v231
    %v233 = vrot.slane %v46, 1
    %v234 = vsel %vm202, %v70, %v233
    %v235 = vrot.slane %v47, 1
    %v236 = vsel %vm202, %v233, %v235
    %v237 = vrot.slane %v48, 1
    %v238 = vsel %vm202, %v235, %v237
    %v239 = vrot.slane %v50, 1
    %v240 = vsel %vm202, %v71, %v239
    %v241 = vrot.slane %v51, 1
    %v242 = vsel %vm202, %v239, %v241
    %v243 = vrot.slane %v52, 1
    %v244 = vsel %vm202, %v241, %v243
    %v245 = vrot.slane %v54, 1
    %v246 = vsel %vm202, %v72, %v245
    %v247 = vrot.slane %v55, 1
    %v248 = vsel %vm202, %v245, %v247
    %v249 = vrot.slane %v56, 1
    %v250 = vsel %vm202, %v247, %v249
    %v291 = vsel %vm202, %v207, %v111
    %v292 = vsel %vm202, %v213, %v118
    %v293 = vsel %vm202, %v219, %v125
    %v294 = vsel %vm202, %v225, %v132
    %v295 = vsel %vm202, %v231, %v139
    %v296 = vsel %vm202, %v237, %v146
    %v297 = vsel %vm202, %v243, %v153
    %v298 = vsel %vm202, %v249, %v160
    %v299 = vmul.f32 %v25, 0.5
    %v300 = vmul.f32 %v26, 0.5
    %v301 = vmul.f32 %v27, 0.5
    %v302 = vmul.f32 %v28, 0.5
    %v303 = vmul.f32 %v29, 0.5
    %v304 = vmul.f32 %v30, 0.5
    %v305 = vmul.f32 %v31, 0.5
    %v306 = vmul.f32 %v32, 0.5
    %v307 = vmul.f32 %v33, 0.5
    %v308 = vmul.f32 %v34, 0.5
    %v309 = vmul.f32 %v35, 0.5
    %v310 = vmul.f32 %v36, 0.5
    %v311 = vmul.f32 %v37, 0.5
    %v312 = vmul.f32 %v38, 0.5
    %v313 = vmul.f32 %v39, 0.5
    %v314 = vmul.f32 %v40, 0.5
    %v315 = vmul.f32 %v41, 0.5
    %v316 = vmul.f32 %v42, 0.5
    %v317 = vmul.f32 %v43, 0.5
    %v318 = vmul.f32 %v44, 0.5
    %v319 = vmul.f32 %v45, 0.5
    %v320 = vmul.f32 %v46, 0.5
    %v321 = vmul.f32 %v47, 0.5
    %v322 = vmul.f32 %v48, 0.5
    %v323 = vmul.f32 %v49, 0.5
    %v324 = vmul.f32 %v50, 0.5
    %v325 = vmul.f32 %v51, 0.5
    %v326 = vmul.f32 %v52, 0.5
    %v327 = vmul.f32 %v53, 0.5
    %v328 = vmul.f32 %v54, 0.5
    %v329 = vmul.f32 %v55, 0.5
    %v330 = vmul.f32 %v56, 0.5
    %v331 = vadd.f32 %v194, %v204
    %v332 = vadd.f32 %v108, %v206
    %v333 = vadd.f32 %v110, %v208
    %v334 = vadd.f32 %v112, %v291
    %v335 = vadd.f32 %v195, %v210
    %v336 = vadd.f32 %v115, %v212
    %v337 = vadd.f32 %v117, %v214
    %v338 = vadd.f32 %v119, %v292
    %v339 = vadd.f32 %v196, %v216
    %v340 = vadd.f32 %v122, %v218
    %v341 = vadd.f32 %v124, %v220
    %v342 = vadd.f32 %v126, %v293
    %v343 = vadd.f32 %v197, %v222
    %v344 = vadd.f32 %v129, %v224
    %v345 = vadd.f32 %v131, %v226
    %v346 = vadd.f32 %v133, %v294
    %v347 = vadd.f32 %v198, %v228
    %v348 = vadd.f32 %v136, %v230
    %v349 = vadd.f32 %v138, %v232
    %v350 = vadd.f32 %v140, %v295
    %v351 = vadd.f32 %v199, %v234
    %v352 = vadd.f32 %v143, %v236
    %v353 = vadd.f32 %v145, %v238
    %v354 = vadd.f32 %v147, %v296
    %v355 = vadd.f32 %v200, %v240
    %v356 = vadd.f32 %v150, %v242
    %v357 = vadd.f32 %v152, %v244
    %v358 = vadd.f32 %v154, %v297
    %v359 = vadd.f32 %v201, %v246
    %v360 = vadd.f32 %v157, %v248
    %v361 = vadd.f32 %v159, %v250
    %v362 = vadd.f32 %v161, %v298
    %v363 = vmul.f32 %v331, 0.25
    %v364 = vmul.f32 %v332, 0.25
    %v365 = vmul.f32 %v333, 0.25
    %v366 = vmul.f32 %v334, 0.25
    %v367 = vmul.f32 %v335, 0.25
    %v368 = vmul.f32 %v336, 0.25
    %v369 = vmul.f32 %v337, 0.25
    %v370 = vmul.f32 %v338, 0.25
    %v371 = vmul.f32 %v339, 0.25
    %v372 = vmul.f32 %v340, 0.25
    %v373 = vmul.f32 %v341, 0.25
    %v374 = vmul.f32 %v342, 0.25
    %v375 = vmul.f32 %v343, 0.25
    %v376 = vmul.f32 %v344, 0.25
    %v377 = vmul.f32 %v345, 0.25
    %v378 = vmul.f32 %v346, 0.25
    %v379 = vmul.f32 %v347, 0.25
    %v380 = vmul.f32 %v348, 0.25
    %v381 = vmul.f32 %v349, 0.25
    %v382 = vmul.f32 %v350, 0.25
    %v383 = vmul.f32 %v351, 0.25
    %v384 = vmul.f32 %v352, 0.25
    %v385 = vmul.f32 %v353, 0.25
    %v386 = vmul.f32 %v354, 0.25
    %v387 = vmul.f32 %v355, 0.25
    %v388 = vmul.f32 %v356, 0.25
    %v389 = vmul.f32 %v357, 0.25
    %v390 = vmul.f32 %v358, 0.25
    %v391 = vmul.f32 %v359, 0.25
    %v392 = vmul.f32 %v360, 0.25
    %v393 = vmul.f32 %v361, 0.25
    %v394 = vmul.f32 %v362, 0.25
    %v395 = vadd.f32 %v299, %v363
    %v396 = vadd.f32 %v300, %v364
    %v397 = vadd.f32 %v301, %v365
    %v398 = vadd.f32 %v302, %v366
    %v399 = vadd.f32 %v303, %v367
    %v400 = vadd.f32 %v304, %v368
    %v401 = vadd.f32 %v305, %v369
    %v402 = vadd.f32 %v306, %v370
    %v403 = vadd.f32 %v307, %v371
    %v404 = vadd.f32 %v308, %v372
    %v405 = vadd.f32 %v309, %v373
    %v406 = vadd.f32 %v310, %v374
    %v407 = vadd.f32 %v311, %v375
    %v408 = vadd.f32 %v312, %v376
    %v409 = vadd.f32 %v313, %v377
    %v410 = vadd.f32 %v314, %v378
    %v411 = vadd.f32 %v315, %v379
    %v412 = vadd.f32 %v316, %v380
    %v413 = vadd.f32 %v317, %v381
    %v414 = vadd.f32 %v318, %v382
    %v415 = vadd.f32 %v319, %v383
    %v416 = vadd.f32 %v320, %v384
    %v417 = vadd.f32 %v321, %v385
    %v418 = vadd.f32 %v322, %v386
    %v419 = vadd.f32 %v323, %v387
    %v420 = vadd.f32 %v324, %v388
    %v421 = vadd.f32 %v325, %v389
    %v422 = vadd.f32 %v326, %v390
    %v423 = vadd.f32 %v327, %v391
    %v424 = vadd.f32 %v328, %v392
    %v425 = vadd.f32 %v329, %v393
    %v426 = vadd.f32 %v330, %v394
    %459 = vrot.lane.b32.xlu0 %v395, 127
    %v460 = vpop.permute.xlu0 %459
    %461 = vrot.lane.b32.xlu0 %v396, 127
    %v462 = vpop.permute.xlu0 %461
    %463 = vrot.lane.b32.xlu0 %v397, 127
    %v464 = vpop.permute.xlu0 %463
    %465 = vrot.lane.b32.xlu0 %v398, 127
    %v466 = vpop.permute.xlu0 %465
    %467 = vrot.lane.b32.xlu0 %v399, 127
    %v468 = vpop.permute.xlu0 %467
    %469 = vrot.lane.b32.xlu0 %v400, 127
    %v470 = vpop.permute.xlu0 %469
    %471 = vrot.lane.b32.xlu0 %v401, 127
    %v472 = vpop.permute.xlu0 %471
    %473 = vrot.lane.b32.xlu0 %v402, 127
    %v474 = vpop.permute.xlu0 %473
    %475 = vrot.lane.b32.xlu0 %v403, 127
    %v476 = vpop.permute.xlu0 %475
    %477 = vrot.lane.b32.xlu0 %v404, 127
    %v478 = vpop.permute.xlu0 %477
    %479 = vrot.lane.b32.xlu0 %v405, 127
    %v480 = vpop.permute.xlu0 %479
    %481 = vrot.lane.b32.xlu0 %v406, 127
    %v482 = vpop.permute.xlu0 %481
    %483 = vrot.lane.b32.xlu0 %v407, 127
    %v484 = vpop.permute.xlu0 %483
    %485 = vrot.lane.b32.xlu0 %v408, 127
    %v486 = vpop.permute.xlu0 %485
    %487 = vrot.lane.b32.xlu0 %v409, 127
    %v488 = vpop.permute.xlu0 %487
    %489 = vrot.lane.b32.xlu0 %v410, 127
    %v490 = vpop.permute.xlu0 %489
    %491 = vrot.lane.b32.xlu0 %v411, 127
    %v492 = vpop.permute.xlu0 %491
    %493 = vrot.lane.b32.xlu0 %v412, 127
    %v494 = vpop.permute.xlu0 %493
    %495 = vrot.lane.b32.xlu0 %v413, 127
    %v496 = vpop.permute.xlu0 %495
    %497 = vrot.lane.b32.xlu0 %v414, 127
    %v498 = vpop.permute.xlu0 %497
    %499 = vrot.lane.b32.xlu0 %v415, 127
    %v500 = vpop.permute.xlu0 %499
    %501 = vrot.lane.b32.xlu0 %v416, 127
    %v502 = vpop.permute.xlu0 %501
    %503 = vrot.lane.b32.xlu0 %v417, 127
    %v504 = vpop.permute.xlu0 %503
    %505 = vrot.lane.b32.xlu0 %v418, 127
    %v506 = vpop.permute.xlu0 %505
    %507 = vrot.lane.b32.xlu0 %v419, 127
    %v508 = vpop.permute.xlu0 %507
    %509 = vrot.lane.b32.xlu0 %v420, 127
    %v510 = vpop.permute.xlu0 %509
    %511 = vrot.lane.b32.xlu0 %v421, 127
    %v512 = vpop.permute.xlu0 %511
    %513 = vrot.lane.b32.xlu0 %v422, 127
    %v514 = vpop.permute.xlu0 %513
    %515 = vrot.lane.b32.xlu0 %v423, 127
    %v516 = vpop.permute.xlu0 %515
    %517 = vrot.lane.b32.xlu0 %v424, 127
    %v518 = vpop.permute.xlu0 %517
    %519 = vrot.lane.b32.xlu0 %v425, 127
    %v520 = vpop.permute.xlu0 %519
    %521 = vrot.lane.b32.xlu0 %v426, 127
    %v522 = vpop.permute.xlu0 %521
    %555 = vrot.lane.b32.xlu0 %v395, 1
    %v556 = vpop.permute.xlu0 %555
    %557 = vrot.lane.b32.xlu0 %v396, 1
    %v558 = vpop.permute.xlu0 %557
    %559 = vrot.lane.b32.xlu0 %v397, 1
    %v560 = vpop.permute.xlu0 %559
    %561 = vrot.lane.b32.xlu0 %v398, 1
    %v562 = vpop.permute.xlu0 %561
    %563 = vrot.lane.b32.xlu0 %v399, 1
    %v564 = vpop.permute.xlu0 %563
    %565 = vrot.lane.b32.xlu0 %v400, 1
    %v566 = vpop.permute.xlu0 %565
    %567 = vrot.lane.b32.xlu0 %v401, 1
    %v568 = vpop.permute.xlu0 %567
    %569 = vrot.lane.b32.xlu0 %v402, 1
    %v570 = vpop.permute.xlu0 %569
    %571 = vrot.lane.b32.xlu0 %v403, 1
    %v572 = vpop.permute.xlu0 %571
    %573 = vrot.lane.b32.xlu0 %v404, 1
    %v574 = vpop.permute.xlu0 %573
    %575 = vrot.lane.b32.xlu0 %v405, 1
    %v576 = vpop.permute.xlu0 %575
    %577 = vrot.lane.b32.xlu0 %v406, 1
    %v578 = vpop.permute.xlu0 %577
    %579 = vrot.lane.b32.xlu0 %v407, 1
    %v580 = vpop.permute.xlu0 %579
    %581 = vrot.lane.b32.xlu0 %v408, 1
    %v582 = vpop.permute.xlu0 %581
    %583 = vrot.lane.b32.xlu0 %v409, 1
    %v584 = vpop.permute.xlu0 %583
    %585 = vrot.lane.b32.xlu0 %v410, 1
    %v586 = vpop.permute.xlu0 %585
    %587 = vrot.lane.b32.xlu0 %v411, 1
    %v588 = vpop.permute.xlu0 %587
    %589 = vrot.lane.b32.xlu0 %v412, 1
    %v590 = vpop.permute.xlu0 %589
    %591 = vrot.lane.b32.xlu0 %v413, 1
    %v592 = vpop.permute.xlu0 %591
    %593 = vrot.lane.b32.xlu0 %v414, 1
    %v594 = vpop.permute.xlu0 %593
    %595 = vrot.lane.b32.xlu0 %v415, 1
    %v596 = vpop.permute.xlu0 %595
    %597 = vrot.lane.b32.xlu0 %v416, 1
    %v598 = vpop.permute.xlu0 %597
    %599 = vrot.lane.b32.xlu0 %v417, 1
    %v600 = vpop.permute.xlu0 %599
    %601 = vrot.lane.b32.xlu0 %v418, 1
    %v602 = vpop.permute.xlu0 %601
    %603 = vrot.lane.b32.xlu0 %v419, 1
    %v604 = vpop.permute.xlu0 %603
    %605 = vrot.lane.b32.xlu0 %v420, 1
    %v606 = vpop.permute.xlu0 %605
    %607 = vrot.lane.b32.xlu0 %v421, 1
    %v608 = vpop.permute.xlu0 %607
    %609 = vrot.lane.b32.xlu0 %v422, 1
    %v610 = vpop.permute.xlu0 %609
    %611 = vrot.lane.b32.xlu0 %v423, 1
    %v612 = vpop.permute.xlu0 %611
    %613 = vrot.lane.b32.xlu0 %v424, 1
    %v614 = vpop.permute.xlu0 %613
    %615 = vrot.lane.b32.xlu0 %v425, 1
    %v616 = vpop.permute.xlu0 %615
    %617 = vrot.lane.b32.xlu0 %v426, 1
    %v618 = vpop.permute.xlu0 %617
    %vm651 = vcmask 7168
    %v652 = vsel %vm651, %v460, %v556
    %v653 = vsel %vm651, %v462, %v558
    %v654 = vsel %vm651, %v464, %v560
    %v655 = vsel %vm651, %v466, %v562
    %v656 = vsel %vm651, %v468, %v564
    %v657 = vsel %vm651, %v470, %v566
    %v658 = vsel %vm651, %v472, %v568
    %v659 = vsel %vm651, %v474, %v570
    %v660 = vsel %vm651, %v476, %v572
    %v661 = vsel %vm651, %v478, %v574
    %v662 = vsel %vm651, %v480, %v576
    %v663 = vsel %vm651, %v482, %v578
    %v664 = vsel %vm651, %v484, %v580
    %v665 = vsel %vm651, %v486, %v582
    %v666 = vsel %vm651, %v488, %v584
    %v667 = vsel %vm651, %v490, %v586
    %v668 = vsel %vm651, %v492, %v588
    %v669 = vsel %vm651, %v494, %v590
    %v670 = vsel %vm651, %v496, %v592
    %v671 = vsel %vm651, %v498, %v594
    %v672 = vsel %vm651, %v500, %v596
    %v673 = vsel %vm651, %v502, %v598
    %v674 = vsel %vm651, %v504, %v600
    %v675 = vsel %vm651, %v506, %v602
    %v676 = vsel %vm651, %v508, %v604
    %v677 = vsel %vm651, %v510, %v606
    %v678 = vsel %vm651, %v512, %v608
    %v679 = vsel %vm651, %v514, %v610
    %v680 = vsel %vm651, %v516, %v612
    %v681 = vsel %vm651, %v518, %v614
    %v682 = vsel %vm651, %v520, %v616
    %v683 = vsel %vm651, %v522, %v618
    %vm684 = vcmask 1039360
    %v685 = vsel %vm684, %v460, %v556
    %v686 = vsel %vm684, %v462, %v558
    %v687 = vsel %vm684, %v464, %v560
    %v688 = vsel %vm684, %v466, %v562
    %v689 = vsel %vm684, %v468, %v564
    %v690 = vsel %vm684, %v470, %v566
    %v691 = vsel %vm684, %v472, %v568
    %v692 = vsel %vm684, %v474, %v570
    %v693 = vsel %vm684, %v476, %v572
    %v694 = vsel %vm684, %v478, %v574
    %v695 = vsel %vm684, %v480, %v576
    %v696 = vsel %vm684, %v482, %v578
    %v697 = vsel %vm684, %v484, %v580
    %v698 = vsel %vm684, %v486, %v582
    %v699 = vsel %vm684, %v488, %v584
    %v700 = vsel %vm684, %v490, %v586
    %v701 = vsel %vm684, %v492, %v588
    %v702 = vsel %vm684, %v494, %v590
    %v703 = vsel %vm684, %v496, %v592
    %v704 = vsel %vm684, %v498, %v594
    %v705 = vsel %vm684, %v500, %v596
    %v706 = vsel %vm684, %v502, %v598
    %v707 = vsel %vm684, %v504, %v600
    %v708 = vsel %vm684, %v506, %v602
    %v709 = vsel %vm684, %v508, %v604
    %v710 = vsel %vm684, %v510, %v606
    %v711 = vsel %vm684, %v512, %v608
    %v712 = vsel %vm684, %v514, %v610
    %v713 = vsel %vm684, %v516, %v612
    %v714 = vsel %vm684, %v518, %v614
    %v715 = vsel %vm684, %v520, %v616
    %v716 = vsel %vm684, %v522, %v618
    %v717 = vmul.f32 %v395, 0.5
    %v718 = vmul.f32 %v396, 0.5
    %v719 = vmul.f32 %v397, 0.5
    %v720 = vmul.f32 %v398, 0.5
    %v721 = vmul.f32 %v399, 0.5
    %v722 = vmul.f32 %v400, 0.5
    %v723 = vmul.f32 %v401, 0.5
    %v724 = vmul.f32 %v402, 0.5
    %v725 = vmul.f32 %v403, 0.5
    %v726 = vmul.f32 %v404, 0.5
    %v727 = vmul.f32 %v405, 0.5
    %v728 = vmul.f32 %v406, 0.5
    %v729 = vmul.f32 %v407, 0.5
    %v730 = vmul.f32 %v408, 0.5
    %v731 = vmul.f32 %v409, 0.5
    %v732 = vmul.f32 %v410, 0.5
    %v733 = vmul.f32 %v411, 0.5
    %v734 = vmul.f32 %v412, 0.5
    %v735 = vmul.f32 %v413, 0.5
    %v736 = vmul.f32 %v414, 0.5
    %v737 = vmul.f32 %v415, 0.5
    %v738 = vmul.f32 %v416, 0.5
    %v739 = vmul.f32 %v417, 0.5
    %v740 = vmul.f32 %v418, 0.5
    %v741 = vmul.f32 %v419, 0.5
    %v742 = vmul.f32 %v420, 0.5
    %v743 = vmul.f32 %v421, 0.5
    %v744 = vmul.f32 %v422, 0.5
    %v745 = vmul.f32 %v423, 0.5
    %v746 = vmul.f32 %v424, 0.5
    %v747 = vmul.f32 %v425, 0.5
    %v748 = vmul.f32 %v426, 0.5
    %v749 = vadd.f32 %v652, %v685
    %v750 = vadd.f32 %v653, %v686
    %v751 = vadd.f32 %v654, %v687
    %v752 = vadd.f32 %v655, %v688
    %v753 = vadd.f32 %v656, %v689
    %v754 = vadd.f32 %v657, %v690
    %v755 = vadd.f32 %v658, %v691
    %v756 = vadd.f32 %v659, %v692
    %v757 = vadd.f32 %v660, %v693
    %v758 = vadd.f32 %v661, %v694
    %v759 = vadd.f32 %v662, %v695
    %v760 = vadd.f32 %v663, %v696
    %v761 = vadd.f32 %v664, %v697
    %v762 = vadd.f32 %v665, %v698
    %v763 = vadd.f32 %v666, %v699
    %v764 = vadd.f32 %v667, %v700
    %v765 = vadd.f32 %v668, %v701
    %v766 = vadd.f32 %v669, %v702
    %v767 = vadd.f32 %v670, %v703
    %v768 = vadd.f32 %v671, %v704
    %v769 = vadd.f32 %v672, %v705
    %v770 = vadd.f32 %v673, %v706
    %v771 = vadd.f32 %v674, %v707
    %v772 = vadd.f32 %v675, %v708
    %v773 = vadd.f32 %v676, %v709
    %v774 = vadd.f32 %v677, %v710
    %v775 = vadd.f32 %v678, %v711
    %v776 = vadd.f32 %v679, %v712
    %v777 = vadd.f32 %v680, %v713
    %v778 = vadd.f32 %v681, %v714
    %v779 = vadd.f32 %v682, %v715
    %v780 = vadd.f32 %v683, %v716
    %v781 = vmul.f32 %v749, 0.25
    %v782 = vmul.f32 %v750, 0.25
    %v783 = vmul.f32 %v751, 0.25
    %v784 = vmul.f32 %v752, 0.25
    %v785 = vmul.f32 %v753, 0.25
    %v786 = vmul.f32 %v754, 0.25
    %v787 = vmul.f32 %v755, 0.25
    %v788 = vmul.f32 %v756, 0.25
    %v789 = vmul.f32 %v757, 0.25
    %v790 = vmul.f32 %v758, 0.25
    %v791 = vmul.f32 %v759, 0.25
    %v792 = vmul.f32 %v760, 0.25
    %v793 = vmul.f32 %v761, 0.25
    %v794 = vmul.f32 %v762, 0.25
    %v795 = vmul.f32 %v763, 0.25
    %v796 = vmul.f32 %v764, 0.25
    %v797 = vmul.f32 %v765, 0.25
    %v798 = vmul.f32 %v766, 0.25
    %v799 = vmul.f32 %v767, 0.25
    %v800 = vmul.f32 %v768, 0.25
    %v801 = vmul.f32 %v769, 0.25
    %v802 = vmul.f32 %v770, 0.25
    %v803 = vmul.f32 %v771, 0.25
    %v804 = vmul.f32 %v772, 0.25
    %v805 = vmul.f32 %v773, 0.25
    %v806 = vmul.f32 %v774, 0.25
    %v807 = vmul.f32 %v775, 0.25
    %v808 = vmul.f32 %v776, 0.25
    %v809 = vmul.f32 %v777, 0.25
    %v810 = vmul.f32 %v778, 0.25
    %v811 = vmul.f32 %v779, 0.25
    %v812 = vmul.f32 %v780, 0.25
    %v813 = vadd.f32 %v717, %v781
    %v814 = vadd.f32 %v718, %v782
    %v815 = vadd.f32 %v719, %v783
    %v816 = vadd.f32 %v720, %v784
    %v817 = vadd.f32 %v721, %v785
    %v818 = vadd.f32 %v722, %v786
    %v819 = vadd.f32 %v723, %v787
    %v820 = vadd.f32 %v724, %v788
    %v821 = vadd.f32 %v725, %v789
    %v822 = vadd.f32 %v726, %v790
    %v823 = vadd.f32 %v727, %v791
    %v824 = vadd.f32 %v728, %v792
    %v825 = vadd.f32 %v729, %v793
    %v826 = vadd.f32 %v730, %v794
    %v827 = vadd.f32 %v731, %v795
    %v828 = vadd.f32 %v732, %v796
    %v829 = vadd.f32 %v733, %v797
    %v830 = vadd.f32 %v734, %v798
    %v831 = vadd.f32 %v735, %v799
    %v832 = vadd.f32 %v736, %v800
    %v833 = vadd.f32 %v737, %v801
    %v834 = vadd.f32 %v738, %v802
    %v835 = vadd.f32 %v739, %v803
    %v836 = vadd.f32 %v740, %v804
    %v837 = vadd.f32 %v741, %v805
    %v838 = vadd.f32 %v742, %v806
    %v839 = vadd.f32 %v743, %v807
    %v840 = vadd.f32 %v744, %v808
    %v841 = vadd.f32 %v745, %v809
    %v842 = vadd.f32 %v746, %v810
    %v843 = vadd.f32 %v747, %v811
    %v844 = vadd.f32 %v748, %v812
    %845 = vst [vmem:[#allocation5] sm:$0xff] %v813
    %846 = vst [vmem:[#allocation5 + $0x8] sm:$0xff] %v814
    %847 = vst [vmem:[#allocation5 + $0x10] sm:$0xff] %v815
    %848 = vst [vmem:[#allocation5 + $0x18] sm:$0xff] %v816
    %849 = vst [vmem:[#allocation5 + $0x20] sm:$0xff] %v817
    %850 = vst [vmem:[#allocation5 + $0x28] sm:$0xff] %v818
    %851 = vst [vmem:[#allocation5 + $0x30] sm:$0xff] %v819
    %852 = vst [vmem:[#allocation5 + $0x38] sm:$0xff] %v820
    %853 = vst [vmem:[#allocation5 + $0x40] sm:$0xff] %v821
    %854 = vst [vmem:[#allocation5 + $0x48] sm:$0xff] %v822
    %855 = vst [vmem:[#allocation5 + $0x50] sm:$0xff] %v823
    %856 = vst [vmem:[#allocation5 + $0x58] sm:$0xff] %v824
    %857 = vst [vmem:[#allocation5 + $0x60] sm:$0xff] %v825
    %858 = vst [vmem:[#allocation5 + $0x68] sm:$0xff] %v826
    %859 = vst [vmem:[#allocation5 + $0x70] sm:$0xff] %v827
    %860 = vst [vmem:[#allocation5 + $0x78] sm:$0xff] %v828
    %861 = vst [vmem:[#allocation5 + $0x80] sm:$0xff] %v829
    %862 = vst [vmem:[#allocation5 + $0x88] sm:$0xff] %v830
    %863 = vst [vmem:[#allocation5 + $0x90] sm:$0xff] %v831
    %864 = vst [vmem:[#allocation5 + $0x98] sm:$0xff] %v832
    %865 = vst [vmem:[#allocation5 + $0xa0] sm:$0xff] %v833
    %866 = vst [vmem:[#allocation5 + $0xa8] sm:$0xff] %v834
    %867 = vst [vmem:[#allocation5 + $0xb0] sm:$0xff] %v835
    %868 = vst [vmem:[#allocation5 + $0xb8] sm:$0xff] %v836
    %869 = vst [vmem:[#allocation5 + $0xc0] sm:$0xff] %v837
    %870 = vst [vmem:[#allocation5 + $0xc8] sm:$0xff] %v838
    %871 = vst [vmem:[#allocation5 + $0xd0] sm:$0xff] %v839
    %872 = vst [vmem:[#allocation5 + $0xd8] sm:$0xff] %v840
    %873 = vst [vmem:[#allocation5 + $0xe0] sm:$0xff] %v841
    %874 = vst [vmem:[#allocation5 + $0xe8] sm:$0xff] %v842
    %875 = vst [vmem:[#allocation5 + $0xf0] sm:$0xff] %v843
    %876 = vst [vmem:[#allocation5 + $0xf8] sm:$0xff] %v844
    // Predicated region
    $region10: #{blur2d.1} parent=1 // pred_check
      _
    $region11: #{blur2d.1} parent=1 // pred_check_branch
      %878 = sbr.rel (0) target = $region13
    $region12: #{blur2d.1} parent=1 // pred_region
      %880 = vsyncadd [#allocation4], 0
      %s881 = sshll.u32 [#allocation5], 4
      %s882 = int_to_ptr.vmem [resolvable:$true] %s881
      %s883 = sshll.u32 %s1, 4
      %s884 = int_to_ptr.hbm [resolvable:$true] %s883
      %889 = dma.vmem_to_hbm [thread:$0]  %s882, 4096, %s884, [#allocation4], 128, 128, 8
    $region13: #{blur2d.1} parent=1 // pred_fallthru
      _
    // Predicated region
    $region14: #{blur2d.1} parent=1 // pred_check
      _
    $region15: #{blur2d.1} parent=1 // pred_check_branch
      %891 = sbr.rel (0) target = $region17
    $region16: #{blur2d.1} parent=1 // pred_region
      %893 = dma.done [#allocation4], 4096
    $region17: #{blur2d.1} parent=1 // pred_fallthru
      _
    %894 = vsyncpa [#allocation3], 1
    %895 = vsyncpa [#allocation4], 1

</llo_original>
